<compile_context>
chip_gen: v7x
topology: tpu7x:2x2x1
jax: 0.10.0
libtpu: 0.0.40
codegen_flags: <defaults>
</compile_context>

<pallas_src>
import jax
import jax.numpy as jnp
from jax import lax
from jax.experimental import pallas as pl
from jax.experimental.pallas import tpu as pltpu
import numpy as np


def _round_up(x, m):
    return ((x + m - 1) // m) * m


def _pad2d(a, rows, cols):
    return jnp.zeros((rows, cols), a.dtype).at[: a.shape[0], : a.shape[1]].set(a)


def poi_encoder_kernel(idx_ref,                      # SMEM scalar-prefetch: (B_pad,) int32
                       table_ref,                    # HBM (pl.ANY): (num_poi, E)
                       w1_ref, b1_ref, w2_ref, b2_ref, w3_ref, b3_ref,   # VMEM, padded
                       x_ref, embed_ref,             # outputs: (tB, OUTp), (tB, E)
                       gbuf, sems):                  # scratch: VMEM (tB, E), DMA sems (tB,)
    i = pl.program_id(0)
    tB, E = gbuf.shape
    base = i * tB

    # ---- row gather: tB concurrent per-row DMAs from the HBM table ----
    @pl.loop(0, tB)
    def _(j):
        row = idx_ref[base + j]
        pltpu.make_async_copy(
            table_ref.at[pl.ds(row, 1), :],
            gbuf.at[pl.ds(j, 1), :],
            sems.at[j],
        ).start()

    @pl.loop(0, tB)
    def _(j):
        pltpu.make_async_copy(
            table_ref.at[pl.ds(0, 1), :],   # shape-only; wait is on sems[j]
            gbuf.at[pl.ds(j, 1), :],
            sems.at[j],
        ).wait()

    embed = gbuf[...]                                   # (tB, E) f32
    embed_ref[...] = embed

    # ---- FFN: Linear -> ReLU -> Linear -> ReLU -> Linear (all lane-dense) ----
    h = jnp.dot(embed, w1_ref[...], preferred_element_type=jnp.float32) + b1_ref[...]
    h = jnp.maximum(h, 0.0)
    h = jnp.dot(h, w2_ref[...], preferred_element_type=jnp.float32) + b2_ref[...]
    h = jnp.maximum(h, 0.0)
    x_ref[...] = jnp.dot(h, w3_ref[...], preferred_element_type=jnp.float32) + b3_ref[...]


def poi_encoder(poi_no, table, w1, b1, w2, b2, w3, b3, *, tB=128):
    """poi_no: int (B,). Returns (x: (B,1) f32, embed: (B, embed_sz) f32)."""
    B = int(poi_no.shape[0])
    num_poi, E = table.shape
    H1, H2, OUT = w1.shape[1], w2.shape[1], w3.shape[1]

    # Lane-dense padded FFN dims (zero-filled -> math unchanged).
    H1p, H2p, OUTp = _round_up(H1, 128), _round_up(H2, 128), _round_up(OUT, 128)

    # Batch tiling: tB rows per grid step (sublane-aligned), batch padded to tB.
    tB = min(tB, _round_up(B, 8))
    B_pad = _round_up(B, tB)
    grid = (B_pad // tB,)

    idx = jnp.zeros((B_pad,), jnp.int32).at[:B].set(poi_no.astype(jnp.int32))

    w1p = _pad2d(w1, E, H1p)
    b1p = _pad2d(b1.reshape(1, -1), 1, H1p)
    w2p = _pad2d(w2, H1p, H2p)
    b2p = _pad2d(b2.reshape(1, -1), 1, H2p)
    w3p = _pad2d(w3, H2p, OUTp)
    b3p = _pad2d(b3.reshape(1, -1), 1, OUTp)

    grid_spec = pltpu.PrefetchScalarGridSpec(
        num_scalar_prefetch=1,
        grid=grid,
        in_specs=[
            pl.BlockSpec(memory_space=pl.ANY),                      # table stays in HBM
            pl.BlockSpec((E, H1p), lambda i, idx: (0, 0)),          # resident weights
            pl.BlockSpec((1, H1p), lambda i, idx: (0, 0)),
            pl.BlockSpec((H1p, H2p), lambda i, idx: (0, 0)),
            pl.BlockSpec((1, H2p), lambda i, idx: (0, 0)),
            pl.BlockSpec((H2p, OUTp), lambda i, idx: (0, 0)),
            pl.BlockSpec((1, OUTp), lambda i, idx: (0, 0)),
        ],
        out_specs=(
            pl.BlockSpec((tB, OUTp), lambda i, idx: (i, 0)),        # lane-dense x slab
            pl.BlockSpec((tB, E), lambda i, idx: (i, 0)),           # embed tile
        ),
        scratch_shapes=[
            pltpu.VMEM((tB, E), jnp.float32),                       # gathered rows
            pltpu.SemaphoreType.DMA((tB,)),
        ],
    )

    x_slab, embed_full = pl.pallas_call(
        poi_encoder_kernel,
        out_shape=(
            jax.ShapeDtypeStruct((B_pad, OUTp), jnp.float32),
            jax.ShapeDtypeStruct((B_pad, E), jnp.float32),
        ),
        grid_spec=grid_spec,
        compiler_params=pltpu.CompilerParams(
            dimension_semantics=("parallel",),          # shards batch across v7x's 2 TCs
            vmem_limit_bytes=32 * 1024 * 1024,          # explicit budget (v7x-safe)
        ),
    )(idx, table, w1p, b1p, w2p, b2p, w3p, b3p)

    return x_slab[:B, :OUT], embed_full[:B, :]


def init_params(key, num_poi, embed_sz, hidden=(60, 60), out_dim=1):
    ks = jax.random.split(key, 7)
    table = jax.random.normal(ks[0], (num_poi, embed_sz), jnp.float32)
    # Linear weights stored as (in, out); uniform init (deterministic, synthetic)
    w1 = jax.random.uniform(ks[1], (embed_sz, hidden[0]), jnp.float32, -0.1, 0.1)
    b1 = jax.random.uniform(ks[2], (hidden[0],), jnp.float32, -0.1, 0.1)
    w2 = jax.random.uniform(ks[3], (hidden[0], hidden[1]), jnp.float32, -0.1, 0.1)
    b2 = jax.random.uniform(ks[4], (hidden[1],), jnp.float32, -0.1, 0.1)
    w3 = jax.random.uniform(ks[5], (hidden[1], out_dim), jnp.float32, -0.1, 0.1)
    b3 = jax.random.uniform(ks[6], (out_dim,), jnp.float32, -0.1, 0.1)
    return table, w1, b1, w2, b2, w3, b3


def reference(poi_no, table, w1, b1, w2, b2, w3, b3):
    embed = table[poi_no]
    h = jnp.maximum(embed @ w1 + b1, 0.0)
    h = jnp.maximum(h @ w2 + b2, 0.0)
    x = h @ w3 + b3
    return x, embed


if __name__ == "__main__":
    num_poi, embed_sz, B = 64, 32, 8
    key = jax.random.PRNGKey(0)
    kp, ki = jax.random.split(key)
    params = init_params(kp, num_poi, embed_sz)
    poi_no = jax.random.randint(ki, (B,), 0, num_poi, dtype=jnp.int32)

    x, embed = poi_encoder(poi_no, *params)
    jax.block_until_ready((x, embed))

    x_ref, embed_ref_ = reference(poi_no, *params)
    assert x.shape == (B, 1) and embed.shape == (B, embed_sz)
    np.testing.assert_allclose(np.asarray(x), np.asarray(x_ref), rtol=1e-5, atol=1e-5)
    np.testing.assert_allclose(np.asarray(embed), np.asarray(embed_ref_), rtol=1e-5, atol=1e-5)
    print("KERNEL_OK")
</pallas_src>

<mosaic_0001>
module attributes {stable_mosaic.version = 11 : i64} {
  func.func @poi_encoder_kernel(%arg0: i32, %arg1: memref<8xi32, #tpu.memory_space<smem>>, %arg2: memref<64x32xf32, #tpu.memory_space<any>>, %arg3: memref<32x128xf32, #tpu.memory_space<vmem>>, %arg4: memref<1x128xf32, #tpu.memory_space<vmem>>, %arg5: memref<128x128xf32, #tpu.memory_space<vmem>>, %arg6: memref<1x128xf32, #tpu.memory_space<vmem>>, %arg7: memref<128x128xf32, #tpu.memory_space<vmem>>, %arg8: memref<1x128xf32, #tpu.memory_space<vmem>>, %arg9: memref<8x128xf32, #tpu.memory_space<vmem>>, %arg10: memref<8x32xf32, #tpu.memory_space<vmem>>, %arg11: memref<8x32xf32, #tpu.memory_space<vmem>>, %arg12: memref<8x!tpu.dma_semaphore, #tpu.memory_space<semaphore_mem>>) attributes {dimension_semantics = [#tpu.dimension_semantics<parallel>], iteration_bounds = array<i64: 1>, scalar_prefetch = 1 : i64, scratch_operands = 2 : i64, tpu.core_type = #tpu.core_type<tc>, window_params = [{}, {pipeline_mode = #tpu.pipeline_mode<synchronous>, transform_indices = @transform_1, window_bounds = array<i64: 32, 128>}, {pipeline_mode = #tpu.pipeline_mode<synchronous>, transform_indices = @transform_2, window_bounds = array<i64: 1, 128>}, {pipeline_mode = #tpu.pipeline_mode<synchronous>, transform_indices = @transform_3, window_bounds = array<i64: 128, 128>}, {pipeline_mode = #tpu.pipeline_mode<synchronous>, transform_indices = @transform_4, window_bounds = array<i64: 1, 128>}, {pipeline_mode = #tpu.pipeline_mode<synchronous>, transform_indices = @transform_5, window_bounds = array<i64: 128, 128>}, {pipeline_mode = #tpu.pipeline_mode<synchronous>, transform_indices = @transform_6, window_bounds = array<i64: 1, 128>}, {transform_indices = @transform_7, window_bounds = array<i64: 8, 128>}, {transform_indices = @transform_8, window_bounds = array<i64: 8, 32>}]} {
    %c8_i32 = arith.constant 8 : i32
    %0 = arith.muli %arg0, %c8_i32 : i32
    %c0_i32 = arith.constant 0 : i32
    %c8_i32_0 = arith.constant 8 : i32
    %1 = arith.addi %c0_i32, %c8_i32_0 : i32
    %c1_i32 = arith.constant 1 : i32
    scf.for %arg13 = %c0_i32 to %1 step %c1_i32  : i32 {
      %c1_i32_27 = arith.constant 1 : i32
      %25 = arith.muli %arg13, %c1_i32_27 : i32
      %c0_i32_28 = arith.constant 0 : i32
      %26 = arith.addi %c0_i32_28, %25 : i32
      %27 = arith.addi %0, %26 : i32
      %28 = arith.index_cast %27 : i32 to index
      %29 = memref.load %arg1[%28] : memref<8xi32, #tpu.memory_space<smem>>
      %c0_i32_29 = arith.constant 0 : i32
      %30 = tpu.memref_slice %arg2[%29, %c0_i32_29] : memref<64x32xf32, #tpu.memory_space<any>> -> memref<1x32xf32, #tpu.memory_space<any>>
      %c0_i32_30 = arith.constant 0 : i32
      %31 = tpu.memref_slice %arg11[%26, %c0_i32_30] : memref<8x32xf32, #tpu.memory_space<vmem>> -> memref<1x32xf32, #tpu.memory_space<vmem>>
      %32 = tpu.memref_slice %arg12[%26] : memref<8x!tpu.dma_semaphore, #tpu.memory_space<semaphore_mem>> -> memref<1x!tpu.dma_semaphore, #tpu.memory_space<semaphore_mem>>
      %33 = tpu.memref_squeeze %32 : memref<1x!tpu.dma_semaphore, #tpu.memory_space<semaphore_mem>> -> memref<!tpu.dma_semaphore, #tpu.memory_space<semaphore_mem>>
      tpu.enqueue_dma source(%30 : memref<1x32xf32, #tpu.memory_space<any>>) target(%31 : memref<1x32xf32, #tpu.memory_space<vmem>>) target_semaphore(%33 : memref<!tpu.dma_semaphore, #tpu.memory_space<semaphore_mem>>)
    }
    %c8_i32_1 = arith.constant 8 : i32
    %c0_i32_2 = arith.constant 0 : i32
    %c8_i32_3 = arith.constant 8 : i32
    %2 = arith.addi %c0_i32_2, %c8_i32_3 : i32
    %c1_i32_4 = arith.constant 1 : i32
    scf.for %arg13 = %c0_i32_2 to %2 step %c1_i32_4  : i32 {
      %c1_i32_27 = arith.constant 1 : i32
      %25 = arith.muli %arg13, %c1_i32_27 : i32
      %c0_i32_28 = arith.constant 0 : i32
      %26 = arith.addi %c0_i32_28, %25 : i32
      %c0_i32_29 = arith.constant 0 : i32
      %c0_i32_30 = arith.constant 0 : i32
      %27 = tpu.memref_slice %arg2[%c0_i32_29, %c0_i32_30] : memref<64x32xf32, #tpu.memory_space<any>> -> memref<1x32xf32, #tpu.memory_space<any>>
      %c0_i32_31 = arith.constant 0 : i32
      %28 = tpu.memref_slice %arg11[%26, %c0_i32_31] : memref<8x32xf32, #tpu.memory_space<vmem>> -> memref<1x32xf32, #tpu.memory_space<vmem>>
      %29 = tpu.memref_slice %arg12[%26] : memref<8x!tpu.dma_semaphore, #tpu.memory_space<semaphore_mem>> -> memref<1x!tpu.dma_semaphore, #tpu.memory_space<semaphore_mem>>
      %30 = tpu.memref_squeeze %29 : memref<1x!tpu.dma_semaphore, #tpu.memory_space<semaphore_mem>> -> memref<!tpu.dma_semaphore, #tpu.memory_space<semaphore_mem>>
      tpu.wait_dma2 semaphore(%30 : memref<!tpu.dma_semaphore, #tpu.memory_space<semaphore_mem>>) src(%27 : memref<1x32xf32, #tpu.memory_space<any>>) dst(%28 : memref<1x32xf32, #tpu.memory_space<vmem>>)
    }
    %c8_i32_5 = arith.constant 8 : i32
    %c0 = arith.constant 0 : index
    %c0_6 = arith.constant 0 : index
    %3 = vector.load %arg11[%c0, %c0_6] : memref<8x32xf32, #tpu.memory_space<vmem>>, vector<8x32xf32>
    %c0_7 = arith.constant 0 : index
    %c0_8 = arith.constant 0 : index
    %4 = vector.load %arg10[%c0_7, %c0_8] : memref<8x32xf32, #tpu.memory_space<vmem>>, vector<8x32xf32>
    tpu.vector_store %arg10[%c0_7, %c0_8], %3 {strides = array<i32>} : memref<8x32xf32, #tpu.memory_space<vmem>>, vector<8x32xf32>,
    %c0_9 = arith.constant 0 : index
    %c0_10 = arith.constant 0 : index
    %5 = vector.load %arg3[%c0_9, %c0_10] : memref<32x128xf32, #tpu.memory_space<vmem>>, vector<32x128xf32>
    %cst = arith.constant dense<0.000000e+00> : vector<8x128xf32>
    %6 = tpu.matmul %3, %5, %cst {dimension_numbers = #tpu.dot_dimension_numbers<[1], [0], [0], [1], [0, 0, 1, 1], [], []>} : vector<8x32xf32>, vector<32x128xf32>, vector<8x128xf32> -> vector<8x128xf32>
    %c0_11 = arith.constant 0 : index
    %c0_12 = arith.constant 0 : index
    %7 = vector.load %arg4[%c0_11, %c0_12] : memref<1x128xf32, #tpu.memory_space<vmem>>, vector<1x128xf32>
    %8 = vector.broadcast %7 : vector<1x128xf32> to vector<8x128xf32>
    %9 = arith.addf %6, %8 : vector<8x128xf32>
    %cst_13 = arith.constant 0.000000e+00 : f32
    %10 = vector.broadcast %cst_13 : f32 to vector<8x128xf32>
    %11 = arith.maximumf %9, %10 : vector<8x128xf32>
    %c0_14 = arith.constant 0 : index
    %c0_15 = arith.constant 0 : index
    %12 = vector.load %arg5[%c0_14, %c0_15] : memref<128x128xf32, #tpu.memory_space<vmem>>, vector<128x128xf32>
    %cst_16 = arith.constant dense<0.000000e+00> : vector<8x128xf32>
    %13 = tpu.matmul %11, %12, %cst_16 {dimension_numbers = #tpu.dot_dimension_numbers<[1], [0], [0], [1], [0, 0, 1, 1], [], []>} : vector<8x128xf32>, vector<128x128xf32>, vector<8x128xf32> -> vector<8x128xf32>
    %c0_17 = arith.constant 0 : index
    %c0_18 = arith.constant 0 : index
    %14 = vector.load %arg6[%c0_17, %c0_18] : memref<1x128xf32, #tpu.memory_space<vmem>>, vector<1x128xf32>
    %15 = vector.broadcast %14 : vector<1x128xf32> to vector<8x128xf32>
    %16 = arith.addf %13, %15 : vector<8x128xf32>
    %cst_19 = arith.constant 0.000000e+00 : f32
    %17 = vector.broadcast %cst_19 : f32 to vector<8x128xf32>
    %18 = arith.maximumf %16, %17 : vector<8x128xf32>
    %c0_20 = arith.constant 0 : index
    %c0_21 = arith.constant 0 : index
    %19 = vector.load %arg7[%c0_20, %c0_21] : memref<128x128xf32, #tpu.memory_space<vmem>>, vector<128x128xf32>
    %cst_22 = arith.constant dense<0.000000e+00> : vector<8x128xf32>
    %20 = tpu.matmul %18, %19, %cst_22 {dimension_numbers = #tpu.dot_dimension_numbers<[1], [0], [0], [1], [0, 0, 1, 1], [], []>} : vector<8x128xf32>, vector<128x128xf32>, vector<8x128xf32> -> vector<8x128xf32>
    %c0_23 = arith.constant 0 : index
    %c0_24 = arith.constant 0 : index
    %21 = vector.load %arg8[%c0_23, %c0_24] : memref<1x128xf32, #tpu.memory_space<vmem>>, vector<1x128xf32>
    %22 = vector.broadcast %21 : vector<1x128xf32> to vector<8x128xf32>
    %23 = arith.addf %20, %22 : vector<8x128xf32>
    %c0_25 = arith.constant 0 : index
    %c0_26 = arith.constant 0 : index
    %24 = vector.load %arg9[%c0_25, %c0_26] : memref<8x128xf32, #tpu.memory_space<vmem>>, vector<8x128xf32>
    tpu.vector_store %arg9[%c0_25, %c0_26], %23 {strides = array<i32>} : memref<8x128xf32, #tpu.memory_space<vmem>>, vector<8x128xf32>,
    return
  }
  func.func @transform_1(%arg0: i32, %arg1: memref<8xi32, #tpu.memory_space<smem>>) -> (i32, i32) {
    %c0_i32 = arith.constant 0 : i32
    %c0_i32_0 = arith.constant 0 : i32
    %c0_i32_1 = arith.constant 0 : i32
    return %c0_i32, %c0_i32_0 : i32, i32
  }
  func.func @transform_2(%arg0: i32, %arg1: memref<8xi32, #tpu.memory_space<smem>>) -> (i32, i32) {
    %c0_i32 = arith.constant 0 : i32
    %c0_i32_0 = arith.constant 0 : i32
    %c0_i32_1 = arith.constant 0 : i32
    return %c0_i32, %c0_i32_0 : i32, i32
  }
  func.func @transform_3(%arg0: i32, %arg1: memref<8xi32, #tpu.memory_space<smem>>) -> (i32, i32) {
    %c0_i32 = arith.constant 0 : i32
    %c0_i32_0 = arith.constant 0 : i32
    %c0_i32_1 = arith.constant 0 : i32
    return %c0_i32, %c0_i32_0 : i32, i32
  }
  func.func @transform_4(%arg0: i32, %arg1: memref<8xi32, #tpu.memory_space<smem>>) -> (i32, i32) {
    %c0_i32 = arith.constant 0 : i32
    %c0_i32_0 = arith.constant 0 : i32
    %c0_i32_1 = arith.constant 0 : i32
    return %c0_i32, %c0_i32_0 : i32, i32
  }
  func.func @transform_5(%arg0: i32, %arg1: memref<8xi32, #tpu.memory_space<smem>>) -> (i32, i32) {
    %c0_i32 = arith.constant 0 : i32
    %c0_i32_0 = arith.constant 0 : i32
    %c0_i32_1 = arith.constant 0 : i32
    return %c0_i32, %c0_i32_0 : i32, i32
  }
  func.func @transform_6(%arg0: i32, %arg1: memref<8xi32, #tpu.memory_space<smem>>) -> (i32, i32) {
    %c0_i32 = arith.constant 0 : i32
    %c0_i32_0 = arith.constant 0 : i32
    %c0_i32_1 = arith.constant 0 : i32
    return %c0_i32, %c0_i32_0 : i32, i32
  }
  func.func @transform_7(%arg0: i32, %arg1: memref<8xi32, #tpu.memory_space<smem>>) -> (i32, i32) {
    %c0_i32 = arith.constant 0 : i32
    %c0_i32_0 = arith.constant 0 : i32
    return %arg0, %c0_i32 : i32, i32
  }
  func.func @transform_8(%arg0: i32, %arg1: memref<8xi32, #tpu.memory_space<smem>>) -> (i32, i32) {
    %c0_i32 = arith.constant 0 : i32
    %c0_i32_0 = arith.constant 0 : i32
    return %arg0, %c0_i32 : i32, i32
  }
}

</mosaic_0001>

<llo_original>
// kernel: tpu_custom_call.1
$region0: #{tpu_custom_call.1}
  #allocation0 [shape = 'u32[]', space=smem, size = 0x4, offset = 0x4, fixed_abs, tag = 'smem constant byte address 0x4 - core index']
  #allocation1 [shape = 'u32[144,128]{1,0:T(1,128)}', space=vmem, size = 0x12000, scoped, tag = 'internal scratch']
  #allocation2 [shape = 'f32[8,32]{1,0:T(8,128)}', space=vmem, size = 0x1000, scoped, tag = 'scratch operand']
  #allocation3 [shape = 's32[8]{0}', space=sflag, size = 0x20, scoped, tag = 'scratch operand']
  #allocation4 [shape = 's32[1]{0}', space=sflag, size = 0x4, scoped, tag = 'scoped memory for tpu_custom_call.1']
  #allocation5 [shape = 'u8[512]{0}', space=smem, size = 0x200, scoped, tag = 'prefetched SMEM operand 0']
  #allocation14 [shape = 's32[]', space=sflag, size = 0x4, offset = 0, fixed_abs, tag = 'sflag constant byte address 0x0 - dummy sync flag']
  %s0 = inlined_call_operand.vmem [shape: s32[8], index: 0, kind: input, shape index: {}]
  %s1 = inlined_call_operand.vmem [shape: f32[64,32], index: 1, kind: input, shape index: {}]
  %s2 = inlined_call_operand.vmem [shape: f32[32,128], index: 2, kind: input, shape index: {}]
  %s3 = inlined_call_operand.vmem [shape: f32[1,128], index: 3, kind: input, shape index: {}]
  %s4 = inlined_call_operand.hbm [shape: f32[128,128], index: 4, kind: input, shape index: {}]
  %s5 = inlined_call_operand.vmem [shape: f32[1,128], index: 5, kind: input, shape index: {}]
  %s6 = inlined_call_operand.hbm [shape: f32[128,128], index: 6, kind: input, shape index: {}]
  %s7 = inlined_call_operand.vmem [shape: f32[1,128], index: 7, kind: input, shape index: {}]
  %s8 = inlined_call_operand.hbm [shape: f32[8,128], index: 8, kind: output, shape index: {0}]
  %s9 = inlined_call_operand.hbm [shape: f32[8,32], index: 9, kind: output, shape index: {1}]
  %10 = xla_tuple %s8, %s9
  %s11 = sld [smem:[#allocation0]]
  $region94: #{tpu_custom_call.1} parent=0
    _
  %s13 = ssub.s32 1, %s11
  %s14 = scalar_select 0, %s13, %s11
  %s15 = sshll.u32 %s0, 4
  %s16 = int_to_ptr.vmem [resolvable:$true] %s15
  %18 = dma.vmem_to_smem %s16, 16, [#allocation5], [#allocation4]
  %19 = dma.done [#allocation4], 16
  %20 = sfence
  $region1: #{tpu_custom_call.1} parent=0
    #allocation6 [shape = 'u8[65536]{0}', space=vmem, size = 0x10000, scoped, tag = 'input window, operand 4, single buffered']
    #allocation7 [shape = 's32[1]{0}', space=sflag, size = 0x4, scoped, tag = 'scoped memory for tpu_custom_call.1']
    #allocation8 [shape = 's32[1]{0}', space=sflag, size = 0x4, scoped, tag = 'scoped memory for tpu_custom_call.1']
    #allocation9 [shape = 'u8[65536]{0}', space=vmem, size = 0x10000, scoped, tag = 'input window, operand 6, single buffered']
    #allocation10 [shape = 's32[1]{0}', space=sflag, size = 0x4, scoped, tag = 'scoped memory for tpu_custom_call.1']
    #allocation11 [shape = 'u8[4096]{0}', space=vmem, size = 0x1000, scoped, tag = 'output window, operand 0, single buffered']
    #allocation12 [shape = 'u8[4096]{0}', space=vmem, size = 0x1000, scoped, tag = 'output window, operand 1, single buffered']
    #allocation13 [shape = 's32[1]{0}', space=sflag, size = 0x4, scoped, tag = 'scoped memory for tpu_custom_call.1']
    %21 = vsyncpa [#allocation7], 0
    %22 = vsyncpa [#allocation10], 0
    %23 = vsyncpa [#allocation8], 0
    %24 = vsyncpa [#allocation13], 0
    // Predicated region
    $region2: #{tpu_custom_call.1} parent=1 // pred_check
      _
    $region3: #{tpu_custom_call.1} parent=1 // pred_check_branch
      %26 = sbr.rel (0) target = $region5
    $region4: #{tpu_custom_call.1} parent=1 // pred_region
      _
    $region5: #{tpu_custom_call.1} parent=1 // pred_fallthru
      _
    // Predicated region
    $region6: #{tpu_custom_call.1} parent=1 // pred_check
      _
    $region7: #{tpu_custom_call.1} parent=1 // pred_check_branch
      %28 = sbr.rel (0) target = $region9
    $region8: #{tpu_custom_call.1} parent=1 // pred_region
      _
    $region9: #{tpu_custom_call.1} parent=1 // pred_fallthru
      _
    // Predicated region
    $region10: #{tpu_custom_call.1} parent=1 // pred_check
      _
    $region11: #{tpu_custom_call.1} parent=1 // pred_check_branch
      %30 = sbr.rel (0) target = $region13
    $region12: #{tpu_custom_call.1} parent=1 // pred_region
      %s32 = ssub.s32 2048, 2048
      %33 = vsyncadd [#allocation7], %s32
      %s34 = sshll.u32 [#allocation6], 4
      %s35 = int_to_ptr.vmem [resolvable:$true] %s34
      %40 = dma.hbm_to_vmem [thread:$0]  %s4, 2048, %s35, [#allocation7], 128, 128, 8
    $region13: #{tpu_custom_call.1} parent=1 // pred_fallthru
      _
    // Predicated region
    $region14: #{tpu_custom_call.1} parent=1 // pred_check
      _
    $region15: #{tpu_custom_call.1} parent=1 // pred_check_branch
      %42 = sbr.rel (0) target = $region17
    $region16: #{tpu_custom_call.1} parent=1 // pred_region
      _
    $region17: #{tpu_custom_call.1} parent=1 // pred_fallthru
      _
    // Predicated region
    $region18: #{tpu_custom_call.1} parent=1 // pred_check
      _
    $region19: #{tpu_custom_call.1} parent=1 // pred_check_branch
      %44 = sbr.rel (0) target = $region21
    $region20: #{tpu_custom_call.1} parent=1 // pred_region
      %s46 = ssub.s32 2048, 2048
      %47 = vsyncadd [#allocation10], %s46
      %s48 = sshll.u32 [#allocation9], 4
      %s49 = int_to_ptr.vmem [resolvable:$true] %s48
      %54 = dma.hbm_to_vmem [thread:$0]  %s6, 2048, %s49, [#allocation10], 128, 128, 8
    $region21: #{tpu_custom_call.1} parent=1 // pred_fallthru
      _
    // Predicated region
    $region22: #{tpu_custom_call.1} parent=1 // pred_check
      _
    $region23: #{tpu_custom_call.1} parent=1 // pred_check_branch
      %56 = sbr.rel (0) target = $region25
    $region24: #{tpu_custom_call.1} parent=1 // pred_region
      _
    $region25: #{tpu_custom_call.1} parent=1 // pred_fallthru
      _
    // Predicated region
    $region26: #{tpu_custom_call.1} parent=1 // pred_check
      _
    $region27: #{tpu_custom_call.1} parent=1 // pred_check_branch
      %58 = sbr.rel (0) target = $region29
    $region28: #{tpu_custom_call.1} parent=1 // pred_region
      %59 = dma.done [#allocation7], 2048
    $region29: #{tpu_custom_call.1} parent=1 // pred_fallthru
      _
    // Predicated region
    $region30: #{tpu_custom_call.1} parent=1 // pred_check
      _
    $region31: #{tpu_custom_call.1} parent=1 // pred_check_branch
      %61 = sbr.rel (0) target = $region33
    $region32: #{tpu_custom_call.1} parent=1 // pred_region
      %62 = dma.done [#allocation10], 2048
    $region33: #{tpu_custom_call.1} parent=1 // pred_fallthru
      _
    %s63 = smul.u32 0, 8
    loop: start=0, step=1, limit=8
    $region34: #{tpu_custom_call.1} parent=1 // loop_pre_header
      _
    $region35: #{tpu_custom_call.1} parent=1 // loop_header
      %s65 = sphi 0, %s69
      %p66 = scmp.ge.s32.totalorder %s65, 8
    $region36: #{tpu_custom_call.1} parent=1 // loop_header_branch
      %68 = sbr.rel (%p66) target = $region40
    $region37: #{tpu_custom_call.1} parent=1 // loop_body
      %s70 = sadd.s32 %s63, %s65
      %s71 = sld [smem:[#allocation5 + %s70]]
      %s72 = scalar_lea.vmem %s1, %s71
      %s73 = scalar_lea.vmem [#allocation2], %s65
      %s74 = scalar_lea.sflag [#allocation3], %s65
      %p76 = scmp.lt.u32.totalorder 1, 8
      %p77 = pneg %p76
      // Predicated region
      $region41: #{tpu_custom_call.1} parent=37 // pred_check
        _
      $region42: #{tpu_custom_call.1} parent=37 // pred_check_branch
        %79 = sbr.rel (%p76) target = $region44
      $region43: #{tpu_custom_call.1} parent=37 // pred_region
        %s94 = sand.u32 1, 7
        %p95 = scmp.eq.s32.totalorder %s94, 0
        %p96 = pneg %p95
        // Predicated region
        $region56: #{tpu_custom_call.1} parent=43 // pred_check
          _
        $region57: #{tpu_custom_call.1} parent=43 // pred_check_branch
          %98 = sbr.rel (%p95) target = $region59
        $region58: #{tpu_custom_call.1} parent=43 // pred_region
          %s99 = sand.u32 1, 7
          %s100 = ssub.s32 1, %s99
          %s101 = scalar_lea.vmem %s72, %s100
          %s102 = ssub.s32 1, %s99
          %s103 = scalar_lea.vmem %s73, %s102 [#allocation2]
          %s104 = sshllo.u32 0, %s99
          loop: start=0, step=1, limit=1
          $region60: #{tpu_custom_call.1} parent=58 // loop_pre_header
            _
          $region61: #{tpu_custom_call.1} parent=58 // loop_header
            %s106 = sphi 0, %s110
            %p107 = scmp.ge.s32.totalorder %s106, 1
            %s111 = sphi %s101, %s101
            %s112 = sphi %s103, %s103
          $region62: #{tpu_custom_call.1} parent=58 // loop_header_branch
            %109 = sbr.rel (%p107) target = $region66
          $region63: #{tpu_custom_call.1} parent=58 // loop_body
            %v113 = vld [vmem:[%s111] sm:%s104]
            %114 = vst [vmem:[%s112] sm:%s104] %v113
          $region64: #{tpu_custom_call.1} parent=58 // loop_footer
            %s110 = sadd.s32 1, %s106
          $region65: #{tpu_custom_call.1} parent=58 // loop_footer_branch
            %105 = sbr.rel target = $region61
          $region66: #{tpu_custom_call.1} parent=58 // loop_exit
            _
        $region59: #{tpu_custom_call.1} parent=43 // pred_fallthru
          _
      $region44: #{tpu_custom_call.1} parent=37 // pred_fallthru
        _
      // Predicated region
      $region45: #{tpu_custom_call.1} parent=37 // pred_check
        %p80 = pneg %p76
      $region46: #{tpu_custom_call.1} parent=37 // pred_check_branch
        %82 = sbr.rel (%p80) target = $region48
      $region47: #{tpu_custom_call.1} parent=37 // pred_region
        %s83 = sshllo.u32 0, 1
        loop: start=0, step=1, limit=1
        $region49: #{tpu_custom_call.1} parent=47 // loop_pre_header
          _
        $region50: #{tpu_custom_call.1} parent=47 // loop_header
          %s85 = sphi 0, %s89
          %p86 = scmp.ge.s32.totalorder %s85, 1
          %s90 = sphi %s72, %s72
          %s91 = sphi %s73, %s73
        $region51: #{tpu_custom_call.1} parent=47 // loop_header_branch
          %88 = sbr.rel (%p86) target = $region55
        $region52: #{tpu_custom_call.1} parent=47 // loop_body
          %v92 = vld [vmem:[%s90] sm:%s83]
          %93 = vst [vmem:[%s91] sm:%s83] %v92
        $region53: #{tpu_custom_call.1} parent=47 // loop_footer
          %s89 = sadd.s32 1, %s85
        $region54: #{tpu_custom_call.1} parent=47 // loop_footer_branch
          %84 = sbr.rel target = $region50
        $region55: #{tpu_custom_call.1} parent=47 // loop_exit
          _
      $region48: #{tpu_custom_call.1} parent=37 // pred_fallthru
        _
      // Predicated region
      $region67: #{tpu_custom_call.1} parent=37 // pred_check
        _
      $region68: #{tpu_custom_call.1} parent=37 // pred_check_branch
        %117 = sbr.rel (0) target = $region70
      $region69: #{tpu_custom_call.1} parent=37 // pred_region
        %118 = vsyncadd %s74, 16
      $region70: #{tpu_custom_call.1} parent=37 // pred_fallthru
        _
    $region38: #{tpu_custom_call.1} parent=1 // loop_footer
      %s69 = sadd.s32 1, %s65
    $region39: #{tpu_custom_call.1} parent=1 // loop_footer_branch
      %64 = sbr.rel target = $region35
    $region40: #{tpu_custom_call.1} parent=1 // loop_exit
      _
    loop: start=0, step=1, limit=8
    $region71: #{tpu_custom_call.1} parent=1 // loop_pre_header
      _
    $region72: #{tpu_custom_call.1} parent=1 // loop_header
      %s120 = sphi 0, %s124
      %p121 = scmp.ge.s32.totalorder %s120, 8
    $region73: #{tpu_custom_call.1} parent=1 // loop_header_branch
      %123 = sbr.rel (%p121) target = $region77
    $region74: #{tpu_custom_call.1} parent=1 // loop_body
      %s125 = scalar_lea.sflag [#allocation3], %s120
      %s126 = smul.u32 1, 1
      %s127 = sshll.u32 %s126, 4
      %128 = dma.done %s125, %s127
    $region75: #{tpu_custom_call.1} parent=1 // loop_footer
      %s124 = sadd.s32 1, %s120
    $region76: #{tpu_custom_call.1} parent=1 // loop_footer_branch
      %119 = sbr.rel target = $region72
    $region77: #{tpu_custom_call.1} parent=1 // loop_exit
      _
    %v129 = vld [vmem:[#allocation2] sm:$0xff]
    %vm130 = vcmask 261120
    %131 = vst.msk [vmem:[#allocation12] sm:$0xff] %vm130, %v129
    %v132 = vld [vmem:[%s2] sm:$0xff]
    %v133 = vld [vmem:[%s2 + $0x8] sm:$0xff]
    %v134 = vld [vmem:[%s2 + $0x10] sm:$0xff]
    %v135 = vld [vmem:[%s2 + $0x18] sm:$0xff]
    %v136 = vld [vmem:[%s3] sm:$0x1]
    %v138 = vlaneseq
    %v139 = vshrl.u32 %v138, 7
    %v140 = vsub.s32 0, %v139
    %v141 = vrot.slane %v136, %v140
    %v144 = vsel %vm130, %v129, 0
    %146 = vmatprep.subr.mxu0 0.0
    %147 = vmatpush1.msra.mxu0 %v132
    %148 = vmatprep.subr.mxu0 0.0
    %149 = vmatpush1.msra.mxu0 %v133
    %150 = vmatprep.subr.mxu0 0.0
    %151 = vmatpush1.msra.mxu0 %v134
    %152 = vmatprep.subr.mxu0 0.0
    %153 = vmatpush1.msra.mxu0 %v135
    %154 = vmatprep.subr.mxu0 0.0
    %155 = vmatpush1.msra.mxu0 0.0
    %156 = vmatprep.subr.mxu0 0.0
    %157 = vmatpush1.msra.mxu0 0.0
    %158 = vmatprep.subr.mxu0 0.0
    %159 = vmatpush1.msra.mxu0 0.0
    %160 = vmatprep.subr.mxu0 0.0
    %161 = vmatpush1.msra.mxu0 0.0
    %162 = vmatprep.subr.mxu0 0.0
    %163 = vmatpush1.msra.mxu0 0.0
    %164 = vmatprep.subr.mxu0 0.0
    %165 = vmatpush1.msra.mxu0 0.0
    %166 = vmatprep.subr.mxu0 0.0
    %167 = vmatpush1.msra.mxu0 0.0
    %168 = vmatprep.subr.mxu0 0.0
    %169 = vmatpush1.msra.mxu0 0.0
    %170 = vmatprep.subr.mxu0 0.0
    %171 = vmatpush1.msra.mxu0 0.0
    %172 = vmatprep.subr.mxu0 0.0
    %173 = vmatpush1.msra.mxu0 0.0
    %174 = vmatprep.subr.mxu0 0.0
    %175 = vmatpush1.msra.mxu0 0.0
    %176 = vmatprep.subr.mxu0 0.0
    %177 = vmatpush1.msra.mxu0 0.0
    %178 = vmatprep.subr.mxu0 0.0
    %179 = vmatpush1.msra.mxu0 0.0
    %180 = vmatprep.subr.mxu0 0.0
    %181 = vmatpush1.msra.mxu0 0.0
    %182 = vmatprep.subr.mxu0 0.0
    %183 = vmatpush1.msra.mxu0 0.0
    %184 = vmatprep.subr.mxu0 0.0
    %185 = vmatpush1.msra.mxu0 0.0
    %186 = vmatprep.subr.mxu0 0.0
    %187 = vmatpush1.msra.mxu0 0.0
    %188 = vmatprep.subr.mxu0 0.0
    %189 = vmatpush1.msra.mxu0 0.0
    %190 = vmatprep.subr.mxu0 0.0
    %191 = vmatpush1.msra.mxu0 0.0
    %192 = vmatprep.subr.mxu0 0.0
    %193 = vmatpush1.msra.mxu0 0.0
    %194 = vmatprep.subr.mxu0 0.0
    %195 = vmatpush1.msra.mxu0 0.0
    %196 = vmatprep.subr.mxu0 0.0
    %197 = vmatpush1.msra.mxu0 0.0
    %198 = vmatprep.subr.mxu0 0.0
    %199 = vmatpush1.msra.mxu0 0.0
    %200 = vmatprep.subr.mxu0 0.0
    %201 = vmatpush1.msra.mxu0 0.0
    %202 = vmatprep.subr.mxu0 0.0
    %203 = vmatpush1.msra.mxu0 0.0
    %204 = vmatprep.subr.mxu0 0.0
    %205 = vmatpush1.msra.mxu0 0.0
    %206 = vmatprep.subr.mxu0 0.0
    %207 = vmatpush1.msra.mxu0 0.0
    %208 = vmatprep.subr.mxu0 0.0
    %209 = vmatpush1.msra.mxu0 0.0
    %210 = vmatprep.mubr.f32.mxu0 0.0
    %211 = vmatmul.mubr.f32.gmra.mrb[0].mxu0 %v144
    %v212 = vpop.f32.mrb[0].mxu0
    %v213 = vadd.f32 %v141, %v212
    %v214 = vpop.f32.mrb[0].mxu0
    %215 = vdwg.mxu0
    %v216 = vmax.f32 %v213, 0.0
    %v217 = vld [vmem:[#allocation6] sm:$0xff]
    %v218 = vld [vmem:[#allocation6 + $0x8] sm:$0xff]
    %v219 = vld [vmem:[#allocation6 + $0x10] sm:$0xff]
    %v220 = vld [vmem:[#allocation6 + $0x18] sm:$0xff]
    %v221 = vld [vmem:[#allocation6 + $0x20] sm:$0xff]
    %v222 = vld [vmem:[#allocation6 + $0x28] sm:$0xff]
    %v223 = vld [vmem:[#allocation6 + $0x30] sm:$0xff]
    %v224 = vld [vmem:[#allocation6 + $0x38] sm:$0xff]
    %v225 = vld [vmem:[#allocation6 + $0x40] sm:$0xff]
    %v226 = vld [vmem:[#allocation6 + $0x48] sm:$0xff]
    %v227 = vld [vmem:[#allocation6 + $0x50] sm:$0xff]
    %v228 = vld [vmem:[#allocation6 + $0x58] sm:$0xff]
    %v229 = vld [vmem:[#allocation6 + $0x60] sm:$0xff]
    %v230 = vld [vmem:[#allocation6 + $0x68] sm:$0xff]
    %v231 = vld [vmem:[#allocation6 + $0x70] sm:$0xff]
    %v232 = vld [vmem:[#allocation6 + $0x78] sm:$0xff]
    %v233 = vld [vmem:[%s5] sm:$0x1]
    %v235 = vlaneseq
    %v236 = vshrl.u32 %v235, 7
    %v237 = vsub.s32 0, %v236
    %v238 = vrot.slane %v233, %v237
    %240 = vmatprep.subr.mxu0 0.0
    %241 = vmatpush1.msra.mxu0 %v217
    %242 = vmatprep.subr.mxu0 0.0
    %243 = vmatpush1.msra.mxu0 %v218
    %244 = vmatprep.subr.mxu0 0.0
    %245 = vmatpush1.msra.mxu0 %v219
    %246 = vmatprep.subr.mxu0 0.0
    %247 = vmatpush1.msra.mxu0 %v220
    %248 = vmatprep.subr.mxu0 0.0
    %249 = vmatpush1.msra.mxu0 %v221
    %250 = vmatprep.subr.mxu0 0.0
    %251 = vmatpush1.msra.mxu0 %v222
    %252 = vmatprep.subr.mxu0 0.0
    %253 = vmatpush1.msra.mxu0 %v223
    %254 = vmatprep.subr.mxu0 0.0
    %255 = vmatpush1.msra.mxu0 %v224
    %256 = vmatprep.subr.mxu0 0.0
    %257 = vmatpush1.msra.mxu0 %v225
    %258 = vmatprep.subr.mxu0 0.0
    %259 = vmatpush1.msra.mxu0 %v226
    %260 = vmatprep.subr.mxu0 0.0
    %261 = vmatpush1.msra.mxu0 %v227
    %262 = vmatprep.subr.mxu0 0.0
    %263 = vmatpush1.msra.mxu0 %v228
    %264 = vmatprep.subr.mxu0 0.0
    %265 = vmatpush1.msra.mxu0 %v229
    %266 = vmatprep.subr.mxu0 0.0
    %267 = vmatpush1.msra.mxu0 %v230
    %268 = vmatprep.subr.mxu0 0.0
    %269 = vmatpush1.msra.mxu0 %v231
    %270 = vmatprep.subr.mxu0 0.0
    %271 = vmatpush1.msra.mxu0 %v232
    %272 = vmatprep.subr.mxu0 0.0
    %273 = vmatpush1.msra.mxu0 0.0
    %274 = vmatprep.subr.mxu0 0.0
    %275 = vmatpush1.msra.mxu0 0.0
    %276 = vmatprep.subr.mxu0 0.0
    %277 = vmatpush1.msra.mxu0 0.0
    %278 = vmatprep.subr.mxu0 0.0
    %279 = vmatpush1.msra.mxu0 0.0
    %280 = vmatprep.subr.mxu0 0.0
    %281 = vmatpush1.msra.mxu0 0.0
    %282 = vmatprep.subr.mxu0 0.0
    %283 = vmatpush1.msra.mxu0 0.0
    %284 = vmatprep.subr.mxu0 0.0
    %285 = vmatpush1.msra.mxu0 0.0
    %286 = vmatprep.subr.mxu0 0.0
    %287 = vmatpush1.msra.mxu0 0.0
    %288 = vmatprep.subr.mxu0 0.0
    %289 = vmatpush1.msra.mxu0 0.0
    %290 = vmatprep.subr.mxu0 0.0
    %291 = vmatpush1.msra.mxu0 0.0
    %292 = vmatprep.subr.mxu0 0.0
    %293 = vmatpush1.msra.mxu0 0.0
    %294 = vmatprep.subr.mxu0 0.0
    %295 = vmatpush1.msra.mxu0 0.0
    %296 = vmatprep.subr.mxu0 0.0
    %297 = vmatpush1.msra.mxu0 0.0
    %298 = vmatprep.subr.mxu0 0.0
    %299 = vmatpush1.msra.mxu0 0.0
    %300 = vmatprep.subr.mxu0 0.0
    %301 = vmatpush1.msra.mxu0 0.0
    %302 = vmatprep.subr.mxu0 0.0
    %303 = vmatpush1.msra.mxu0 0.0
    %304 = vmatprep.mubr.f32.mxu0 0.0
    %305 = vmatmul.mubr.f32.gmra.mrb[0].mxu0 %v216
    %v306 = vpop.f32.mrb[0].mxu0
    %v307 = vadd.f32 %v238, %v306
    %v308 = vpop.f32.mrb[0].mxu0
    %309 = vdwg.mxu0
    %v310 = vmax.f32 %v307, 0.0
    %v311 = vld [vmem:[#allocation9] sm:$0xff]
    %v312 = vld [vmem:[#allocation9 + $0x8] sm:$0xff]
    %v313 = vld [vmem:[#allocation9 + $0x10] sm:$0xff]
    %v314 = vld [vmem:[#allocation9 + $0x18] sm:$0xff]
    %v315 = vld [vmem:[#allocation9 + $0x20] sm:$0xff]
    %v316 = vld [vmem:[#allocation9 + $0x28] sm:$0xff]
    %v317 = vld [vmem:[#allocation9 + $0x30] sm:$0xff]
    %v318 = vld [vmem:[#allocation9 + $0x38] sm:$0xff]
    %v319 = vld [vmem:[#allocation9 + $0x40] sm:$0xff]
    %v320 = vld [vmem:[#allocation9 + $0x48] sm:$0xff]
    %v321 = vld [vmem:[#allocation9 + $0x50] sm:$0xff]
    %v322 = vld [vmem:[#allocation9 + $0x58] sm:$0xff]
    %v323 = vld [vmem:[#allocation9 + $0x60] sm:$0xff]
    %v324 = vld [vmem:[#allocation9 + $0x68] sm:$0xff]
    %v325 = vld [vmem:[#allocation9 + $0x70] sm:$0xff]
    %v326 = vld [vmem:[#allocation9 + $0x78] sm:$0xff]
    %v327 = vld [vmem:[%s7] sm:$0x1]
    %v329 = vlaneseq
    %v330 = vshrl.u32 %v329, 7
    %v331 = vsub.s32 0, %v330
    %v332 = vrot.slane %v327, %v331
    %334 = vmatprep.subr.mxu0 0.0
    %335 = vmatpush1.msra.mxu0 %v311
    %336 = vmatprep.subr.mxu0 0.0
    %337 = vmatpush1.msra.mxu0 %v312
    %338 = vmatprep.subr.mxu0 0.0
    %339 = vmatpush1.msra.mxu0 %v313
    %340 = vmatprep.subr.mxu0 0.0
    %341 = vmatpush1.msra.mxu0 %v314
    %342 = vmatprep.subr.mxu0 0.0
    %343 = vmatpush1.msra.mxu0 %v315
    %344 = vmatprep.subr.mxu0 0.0
    %345 = vmatpush1.msra.mxu0 %v316
    %346 = vmatprep.subr.mxu0 0.0
    %347 = vmatpush1.msra.mxu0 %v317
    %348 = vmatprep.subr.mxu0 0.0
    %349 = vmatpush1.msra.mxu0 %v318
    %350 = vmatprep.subr.mxu0 0.0
    %351 = vmatpush1.msra.mxu0 %v319
    %352 = vmatprep.subr.mxu0 0.0
    %353 = vmatpush1.msra.mxu0 %v320
    %354 = vmatprep.subr.mxu0 0.0
    %355 = vmatpush1.msra.mxu0 %v321
    %356 = vmatprep.subr.mxu0 0.0
    %357 = vmatpush1.msra.mxu0 %v322
    %358 = vmatprep.subr.mxu0 0.0
    %359 = vmatpush1.msra.mxu0 %v323
    %360 = vmatprep.subr.mxu0 0.0
    %361 = vmatpush1.msra.mxu0 %v324
    %362 = vmatprep.subr.mxu0 0.0
    %363 = vmatpush1.msra.mxu0 %v325
    %364 = vmatprep.subr.mxu0 0.0
    %365 = vmatpush1.msra.mxu0 %v326
    %366 = vmatprep.subr.mxu0 0.0
    %367 = vmatpush1.msra.mxu0 0.0
    %368 = vmatprep.subr.mxu0 0.0
    %369 = vmatpush1.msra.mxu0 0.0
    %370 = vmatprep.subr.mxu0 0.0
    %371 = vmatpush1.msra.mxu0 0.0
    %372 = vmatprep.subr.mxu0 0.0
    %373 = vmatpush1.msra.mxu0 0.0
    %374 = vmatprep.subr.mxu0 0.0
    %375 = vmatpush1.msra.mxu0 0.0
    %376 = vmatprep.subr.mxu0 0.0
    %377 = vmatpush1.msra.mxu0 0.0
    %378 = vmatprep.subr.mxu0 0.0
    %379 = vmatpush1.msra.mxu0 0.0
    %380 = vmatprep.subr.mxu0 0.0
    %381 = vmatpush1.msra.mxu0 0.0
    %382 = vmatprep.subr.mxu0 0.0
    %383 = vmatpush1.msra.mxu0 0.0
    %384 = vmatprep.subr.mxu0 0.0
    %385 = vmatpush1.msra.mxu0 0.0
    %386 = vmatprep.subr.mxu0 0.0
    %387 = vmatpush1.msra.mxu0 0.0
    %388 = vmatprep.subr.mxu0 0.0
    %389 = vmatpush1.msra.mxu0 0.0
    %390 = vmatprep.subr.mxu0 0.0
    %391 = vmatpush1.msra.mxu0 0.0
    %392 = vmatprep.subr.mxu0 0.0
    %393 = vmatpush1.msra.mxu0 0.0
    %394 = vmatprep.subr.mxu0 0.0
    %395 = vmatpush1.msra.mxu0 0.0
    %396 = vmatprep.subr.mxu0 0.0
    %397 = vmatpush1.msra.mxu0 0.0
    %398 = vmatprep.mubr.f32.mxu0 0.0
    %399 = vmatmul.mubr.f32.gmra.mrb[0].mxu0 %v310
    %v400 = vpop.f32.mrb[0].mxu0
    %v401 = vadd.f32 %v332, %v400
    %v402 = vpop.f32.mrb[0].mxu0
    %403 = vdwg.mxu0
    %404 = vst [vmem:[#allocation11] sm:$0xff] %v401
    // Predicated region
    $region78: #{tpu_custom_call.1} parent=1 // pred_check
      _
    $region79: #{tpu_custom_call.1} parent=1 // pred_check_branch
      %406 = sbr.rel (0) target = $region81
    $region80: #{tpu_custom_call.1} parent=1 // pred_region
      %s408 = ssub.s32 128, 128
      %409 = vsyncadd [#allocation8], %s408
      %s411 = sshll.u32 [#allocation11], 4
      %s412 = int_to_ptr.vmem [resolvable:$true] %s411
      %414 = dma.vmem_to_hbm [thread:$0]  %s412, 128, %s8, [#allocation8]
    $region81: #{tpu_custom_call.1} parent=1 // pred_fallthru
      _
    // Predicated region
    $region82: #{tpu_custom_call.1} parent=1 // pred_check
      _
    $region83: #{tpu_custom_call.1} parent=1 // pred_check_branch
      %416 = sbr.rel (0) target = $region85
    $region84: #{tpu_custom_call.1} parent=1 // pred_region
      %s418 = ssub.s32 128, 128
      %419 = vsyncadd [#allocation13], %s418
      %s421 = sshll.u32 [#allocation12], 4
      %s422 = int_to_ptr.vmem [resolvable:$true] %s421
      %424 = dma.vmem_to_hbm [thread:$0]  %s422, 128, %s9, [#allocation13]
    $region85: #{tpu_custom_call.1} parent=1 // pred_fallthru
      _
    // Predicated region
    $region86: #{tpu_custom_call.1} parent=1 // pred_check
      _
    $region87: #{tpu_custom_call.1} parent=1 // pred_check_branch
      %426 = sbr.rel (0) target = $region89
    $region88: #{tpu_custom_call.1} parent=1 // pred_region
      %427 = dma.done [#allocation8], 128
    $region89: #{tpu_custom_call.1} parent=1 // pred_fallthru
      _
    // Predicated region
    $region90: #{tpu_custom_call.1} parent=1 // pred_check
      _
    $region91: #{tpu_custom_call.1} parent=1 // pred_check_branch
      %429 = sbr.rel (0) target = $region93
    $region92: #{tpu_custom_call.1} parent=1 // pred_region
      %430 = dma.done [#allocation13], 128
    $region93: #{tpu_custom_call.1} parent=1 // pred_fallthru
      _
    %431 = vsyncpa [#allocation7], 1
    %432 = vsyncpa [#allocation10], 1
    %433 = vsyncpa [#allocation8], 1
    %434 = vsyncpa [#allocation13], 1
  %435 = vsyncmov [#allocation3]
  %s436 = vpop.sfrf %435
  %p437 = scmp.eq.s32.totalorder %s436, 0
  %p438 = pneg %p437
  %440 = shalt.err (%p438)
  %s441 = scalar_lea.sflag [#allocation3], 1
  %442 = vsyncmov %s441
  %s443 = vpop.sfrf %442
  %p444 = scmp.eq.s32.totalorder %s443, 0
  %p445 = pneg %p444
  %447 = shalt.err (%p445)
  %s448 = scalar_lea.sflag [#allocation3], 2
  %449 = vsyncmov %s448
  %s450 = vpop.sfrf %449
  %p451 = scmp.eq.s32.totalorder %s450, 0
  %p452 = pneg %p451
  %454 = shalt.err (%p452)
  %s455 = scalar_lea.sflag [#allocation3], 3
  %456 = vsyncmov %s455
  %s457 = vpop.sfrf %456
  %p458 = scmp.eq.s32.totalorder %s457, 0
  %p459 = pneg %p458
  %461 = shalt.err (%p459)
  %s462 = scalar_lea.sflag [#allocation3], 4
  %463 = vsyncmov %s462
  %s464 = vpop.sfrf %463
  %p465 = scmp.eq.s32.totalorder %s464, 0
  %p466 = pneg %p465
  %468 = shalt.err (%p466)
  %s469 = scalar_lea.sflag [#allocation3], 5
  %470 = vsyncmov %s469
  %s471 = vpop.sfrf %470
  %p472 = scmp.eq.s32.totalorder %s471, 0
  %p473 = pneg %p472
  %475 = shalt.err (%p473)
  %s476 = scalar_lea.sflag [#allocation3], 6
  %477 = vsyncmov %s476
  %s478 = vpop.sfrf %477
  %p479 = scmp.eq.s32.totalorder %s478, 0
  %p480 = pneg %p479
  %482 = shalt.err (%p480)
  %s483 = scalar_lea.sflag [#allocation3], 7
  %484 = vsyncmov %s483
  %s485 = vpop.sfrf %484
  %p486 = scmp.eq.s32.totalorder %s485, 0
  %p487 = pneg %p486
  %489 = shalt.err (%p487)

</llo_original>
